<compile_context>
chip_gen: v7x
topology: tpu7x:2x2x1
jax: 0.10.0
libtpu: 0.0.40
codegen_flags: <defaults>
</compile_context>

<pallas_src>
import math

import jax
import jax.numpy as jnp
from jax.experimental import pallas as pl
from jax.experimental.pallas import tpu as pltpu


def _cdiv(a, b):
    return -(-a // b)


def _round_up(a, b):
    return _cdiv(a, b) * b


def _balanced_tile(dim, cap, grain, min_tiles=1):
    """Largest tile <= ~cap (multiple of `grain`) that keeps padding waste small."""
    n = max(min_tiles, _cdiv(dim, cap))
    return _round_up(_cdiv(dim, n), grain)


def _make_eq_linear_kernel(scale, has_bias, use_acc_scratch):
    """Builds the grid-(i, j, k) matmul body.

    Refs (in order): x (tm, tk), w (tk, tn), [bias (1, tn)], out (tm, tn),
    [acc scratch (tm, tn) f32 — only when the output dtype is not f32].
    """

    def kernel(*refs):
        if has_bias:
            x_ref, w_ref, b_ref = refs[:3]
            rest = refs[3:]
        else:
            x_ref, w_ref = refs[:2]
            b_ref = None
            rest = refs[2:]
        o_ref = rest[0]
        acc_ref = rest[1] if use_acc_scratch else o_ref  # f32 out: accumulate in place

        k = pl.program_id(2)

        @pl.when(k == 0)
        def _():
            acc_ref[...] = jnp.zeros_like(acc_ref)

        # Weight is pre-stored as (K, O): plain lane-aligned MXU contraction,
        # no in-kernel transpose / XLU relayout. Accumulation is always f32.
        acc_ref[...] += jnp.dot(x_ref[...], w_ref[...],
                                preferred_element_type=jnp.float32)

        @pl.when(k == pl.num_programs(2) - 1)
        def _():
            # Equalized-LR scale applied once to the f32 accumulator (exactly
            # equivalent to scaling the weight); bias fused in.
            y = acc_ref[...] * jnp.float32(scale)
            if has_bias:
                y = y + b_ref[...]
            o_ref[...] = y.astype(o_ref.dtype)

    return kernel


def make_equalized_linear(weight, bias=None, *, compute_dtype=jnp.bfloat16,
                          out_dtype=None, tm_cap=512, tn_cap=512, tk_cap=None):
    """Prepare EqualizedLinear parameters once; returns apply(x).

    weight: (out_features, in_features); bias: (out_features,) or None.
    compute_dtype: dtype fed to the MXU. Default bf16 — the fast path on v5e, v6e
      and v7x (2-4x MXU throughput, half the x/w DMA bytes). Scale, bias and the
      accumulation always stay f32; pass jnp.float32 for torch-exact results.
    out_dtype: output dtype; defaults to x.dtype (torch dtype-preserving semantics).

    The weight is transposed to (K, O), cast to compute_dtype and zero-padded to
    tile multiples HERE, once, so the per-forward path never rewrites it in HBM.
    """
    O, K = weight.shape
    scale = math.sqrt(2.0 / K)  # fan_in = in_features
    c_itemsize = jnp.dtype(compute_dtype).itemsize
    if tk_cap is None:
        tk_cap = 2048 if c_itemsize < 4 else 1024

    # >=2 output tiles whenever possible so the parallel (i, j) grid has at least
    # two blocks — keeps both v7x TensorCores busy even when the batch fits one
    # M tile. (v5e/v6e have a single TC; the extra x re-read is negligible.)
    min_o_tiles = 2 if O > 128 else 1
    tn = _balanced_tile(O, tn_cap, 128, min_tiles=min_o_tiles)
    tk = _balanced_tile(K, tk_cap, 128)
    Op = _round_up(O, tn)
    Kp = _round_up(K, tk)

    # --- one-time parameter prep (hoisted out of the per-call path) ---
    wt = jnp.asarray(weight).T.astype(compute_dtype)          # (K, O), MXU dtype
    if (Kp, Op) != (K, O):
        wt = jnp.pad(wt, ((0, Kp - K), (0, Op - O)))
    if bias is not None:
        b2d = jnp.asarray(bias).reshape(1, O).astype(jnp.float32)
        if Op != O:
            b2d = jnp.pad(b2d, ((0, 0), (0, Op - O)))
    else:
        b2d = None

    def apply(x):
        N = x.shape[0]
        x_flat = x.reshape(N, -1)                              # torch's x.view(N, -1)
        assert x_flat.shape[1] == K, "flattened input size must equal in_features"
        odt = jnp.dtype(x.dtype) if out_dtype is None else jnp.dtype(out_dtype)

        # Sublane grain: 16 when any packed (sub-32-bit) dtype is involved.
        grain = 16 if (c_itemsize < 4 or odt.itemsize < 4) else 8
        tm = _balanced_tile(N, tm_cap, grain)
        Np = _round_up(N, tm)

        xp = x_flat.astype(compute_dtype)
        if (Np, Kp) != (N, K):
            # Zero-padded K columns contribute 0 to the sum; padded N rows are
            # sliced off below. Keeps the output lane dimension dense.
            xp = jnp.pad(xp, ((0, Np - N), (0, Kp - K)))

        grid = (Np // tm, Op // tn, Kp // tk)                  # reduction (K) last
        use_scratch = odt != jnp.dtype(jnp.float32)

        x_spec = pl.BlockSpec((tm, tk), lambda i, j, k: (i, k))
        w_spec = pl.BlockSpec((tk, tn), lambda i, j, k: (k, j))
        o_spec = pl.BlockSpec((tm, tn), lambda i, j, k: (i, j))
        scratch = [pltpu.VMEM((tm, tn), jnp.float32)] if use_scratch else []

        in_specs = [x_spec, w_spec]
        args = [xp, wt]
        if bias is not None:
            in_specs.append(pl.BlockSpec((1, tn), lambda i, j, k: (0, j)))
            args.append(b2d)

        # Accurate advisory traffic: x streamed once per O tile, w once per M tile.
        cost = pl.CostEstimate(
            flops=2 * Np * Kp * Op,
            transcendentals=0,
            bytes_accessed=(Np * Kp * c_itemsize * (Op // tn)
                            + Kp * Op * c_itemsize * (Np // tm)
                            + (Op * 4 * (Np // tm) if bias is not None else 0)
                            + Np * Op * odt.itemsize),
        )
        cparams = pltpu.CompilerParams(
            dimension_semantics=("parallel", "parallel", "arbitrary"),
            # Double-buffered tiles use ~10-20 MiB; 48 MiB keeps headroom under
            # v7x's 64 MiB physical VMEM and is trivially available on v5e/v6e.
            vmem_limit_bytes=48 * 1024 * 1024,
        )

        kernel = _make_eq_linear_kernel(scale, bias is not None, use_scratch)

        y_pad = pl.pallas_call(
            kernel,
            out_shape=jax.ShapeDtypeStruct((Np, Op), odt),
            grid_spec=pltpu.PrefetchScalarGridSpec(
                num_scalar_prefetch=0,
                grid=grid,
                in_specs=in_specs,
                out_specs=o_spec,
                scratch_shapes=scratch,
            ),
            compiler_params=cparams,
            cost_estimate=cost,
        )(*args)

        return y_pad[:N, :O]

    return apply


def equalized_linear(x, weight, bias=None, **kwargs):
    """One-shot convenience wrapper (prefer make_equalized_linear for reuse)."""
    return make_equalized_linear(weight, bias, **kwargs)(x)


if __name__ == "__main__":
    key = jax.random.PRNGKey(0)
    k_x, k_w = jax.random.split(key)

    # Small shapes: x is NCHW (2, 4, 4, 4) -> flattened in_features = 64.
    N, C, H, W = 2, 4, 4, 4
    in_features = C * H * W
    out_features = 32

    x = jax.random.normal(k_x, (N, C, H, W), dtype=jnp.float32)
    # Deterministic parameter init mirroring __init__:
    #   weight ~ N(0, 1) of shape (out_features, in_features); bias = 0.
    weight = jax.random.normal(k_w, (out_features, in_features), dtype=jnp.float32)
    bias = jnp.zeros((out_features,), jnp.float32)

    scale = math.sqrt(2.0 / in_features)
    x_flat = x.reshape(N, -1)
    y_ref = x_flat @ (weight * scale).T + bias

    # Fast path (default): bf16 MXU compute, f32 accumulate/scale/bias, f32 output.
    apply_bf16 = make_equalized_linear(weight, bias)
    y_bf16 = jax.block_until_ready(apply_bf16(x))
    assert y_bf16.shape == (N, out_features)
    assert y_bf16.dtype == x.dtype
    assert jnp.allclose(y_bf16, y_ref, atol=6e-2, rtol=6e-2)

    # Exact path: f32 compute; no acc scratch (accumulates into the output tile).
    apply_f32 = make_equalized_linear(weight, bias, compute_dtype=jnp.float32)
    y_f32 = jax.block_until_ready(apply_f32(x))
    assert jnp.allclose(y_f32, y_ref, atol=1e-4, rtol=1e-4)

    # bias=False path: no bias DMA, no add in the kernel.
    apply_nb = make_equalized_linear(weight, None, compute_dtype=jnp.float32)
    y_nb = jax.block_until_ready(apply_nb(x))
    assert jnp.allclose(y_nb, x_flat @ (weight * scale).T, atol=1e-4, rtol=1e-4)

    # bf16-in / bf16-out path: exercises the f32 accumulator scratch + narrow store.
    y_nbf = jax.block_until_ready(apply_bf16(x.astype(jnp.bfloat16)))
    assert y_nbf.dtype == jnp.bfloat16
    assert jnp.allclose(y_nbf.astype(jnp.float32), y_ref, atol=1e-1, rtol=1e-1)

    print("KERNEL_OK")
</pallas_src>

<mosaic_0001>
module attributes {stable_mosaic.version = 11 : i64} {
  func.func @kernel(%arg0: i32, %arg1: i32, %arg2: i32, %arg3: memref<16x128xbf16, #tpu.memory_space<vmem>>, %arg4: memref<128x128xbf16, #tpu.memory_space<vmem>>, %arg5: memref<1x128xf32, #tpu.memory_space<vmem>>, %arg6: memref<16x128xf32, #tpu.memory_space<vmem>>) attributes {dimension_semantics = [#tpu.dimension_semantics<parallel>, #tpu.dimension_semantics<parallel>, #tpu.dimension_semantics<arbitrary>], iteration_bounds = array<i64: 1, 1, 1>, scalar_prefetch = 0 : i64, scratch_operands = 0 : i64, tpu.core_type = #tpu.core_type<tc>, window_params = [{transform_indices = @transform_0, window_bounds = array<i64: 16, 128>}, {transform_indices = @transform_1, window_bounds = array<i64: 128, 128>}, {transform_indices = @transform_2, window_bounds = array<i64: 1, 128>}, {transform_indices = @transform_3, window_bounds = array<i64: 16, 128>}]} {
    %c0_i32 = arith.constant 0 : i32
    %0 = arith.cmpi eq, %arg2, %c0_i32 : i32
    %1 = arith.extui %0 : i1 to i32
    %c0_i32_0 = arith.constant 0 : i32
    %2 = arith.cmpi ne, %1, %c0_i32_0 : i32
    scf.if %2 {
      %cst_10 = arith.constant 0.000000e+00 : f32
      %12 = vector.broadcast %cst_10 : f32 to vector<16x128xf32>
      %c0_11 = arith.constant 0 : index
      %c0_12 = arith.constant 0 : index
      %13 = vector.load %arg6[%c0_11, %c0_12] : memref<16x128xf32, #tpu.memory_space<vmem>>, vector<16x128xf32>
      tpu.vector_store %arg6[%c0_11, %c0_12], %12 {strides = array<i32>} : memref<16x128xf32, #tpu.memory_space<vmem>>, vector<16x128xf32>,
    } else {
    }
    %c0 = arith.constant 0 : index
    %c0_1 = arith.constant 0 : index
    %3 = vector.load %arg6[%c0, %c0_1] : memref<16x128xf32, #tpu.memory_space<vmem>>, vector<16x128xf32>
    %c0_2 = arith.constant 0 : index
    %c0_3 = arith.constant 0 : index
    %4 = vector.load %arg3[%c0_2, %c0_3] : memref<16x128xbf16, #tpu.memory_space<vmem>>, vector<16x128xbf16>
    %c0_4 = arith.constant 0 : index
    %c0_5 = arith.constant 0 : index
    %5 = vector.load %arg4[%c0_4, %c0_5] : memref<128x128xbf16, #tpu.memory_space<vmem>>, vector<128x128xbf16>
    %cst = arith.constant dense<0.000000e+00> : vector<16x128xf32>
    %6 = tpu.matmul %4, %5, %cst {dimension_numbers = #tpu.dot_dimension_numbers<[1], [0], [0], [1], [0, 0, 1, 1], [], []>} : vector<16x128xbf16>, vector<128x128xbf16>, vector<16x128xf32> -> vector<16x128xf32>
    %7 = arith.addf %3, %6 : vector<16x128xf32>
    %c0_6 = arith.constant 0 : index
    %c0_7 = arith.constant 0 : index
    %8 = vector.load %arg6[%c0_6, %c0_7] : memref<16x128xf32, #tpu.memory_space<vmem>>, vector<16x128xf32>
    tpu.vector_store %arg6[%c0_6, %c0_7], %7 {strides = array<i32>} : memref<16x128xf32, #tpu.memory_space<vmem>>, vector<16x128xf32>,
    %c0_i32_8 = arith.constant 0 : i32
    %9 = arith.cmpi eq, %arg2, %c0_i32_8 : i32
    %10 = arith.extui %9 : i1 to i32
    %c0_i32_9 = arith.constant 0 : i32
    %11 = arith.cmpi ne, %10, %c0_i32_9 : i32
    scf.if %11 {
      %c0_10 = arith.constant 0 : index
      %c0_11 = arith.constant 0 : index
      %12 = vector.load %arg6[%c0_10, %c0_11] : memref<16x128xf32, #tpu.memory_space<vmem>>, vector<16x128xf32>
      %cst_12 = arith.constant 0.176776692 : f32
      %13 = vector.broadcast %cst_12 : f32 to vector<16x128xf32>
      %14 = arith.mulf %12, %13 : vector<16x128xf32>
      %c0_13 = arith.constant 0 : index
      %c0_14 = arith.constant 0 : index
      %15 = vector.load %arg5[%c0_13, %c0_14] : memref<1x128xf32, #tpu.memory_space<vmem>>, vector<1x128xf32>
      %16 = vector.broadcast %15 : vector<1x128xf32> to vector<16x128xf32>
      %17 = arith.addf %14, %16 : vector<16x128xf32>
      %c0_15 = arith.constant 0 : index
      %c0_16 = arith.constant 0 : index
      %18 = vector.load %arg6[%c0_15, %c0_16] : memref<16x128xf32, #tpu.memory_space<vmem>>, vector<16x128xf32>
      tpu.vector_store %arg6[%c0_15, %c0_16], %17 {strides = array<i32>} : memref<16x128xf32, #tpu.memory_space<vmem>>, vector<16x128xf32>,
    } else {
    }
    return
  }
  func.func @transform_0(%arg0: i32, %arg1: i32, %arg2: i32) -> (i32, i32) {
    %c0_i32 = arith.constant 0 : i32
    return %arg0, %arg2 : i32, i32
  }
  func.func @transform_1(%arg0: i32, %arg1: i32, %arg2: i32) -> (i32, i32) {
    %c0_i32 = arith.constant 0 : i32
    return %arg2, %arg1 : i32, i32
  }
  func.func @transform_2(%arg0: i32, %arg1: i32, %arg2: i32) -> (i32, i32) {
    %c0_i32 = arith.constant 0 : i32
    %c0_i32_0 = arith.constant 0 : i32
    return %c0_i32, %arg1 : i32, i32
  }
  func.func @transform_3(%arg0: i32, %arg1: i32, %arg2: i32) -> (i32, i32) {
    %c0_i32 = arith.constant 0 : i32
    return %arg0, %arg1 : i32, i32
  }
}

</mosaic_0001>

<llo_original>
// kernel: tpu_custom_call.1
$region0: #{tpu_custom_call.1}
  #allocation0 [shape = 'u32[]', space=smem, size = 0x4, offset = 0x4, fixed_abs, tag = 'smem constant byte address 0x4 - core index']
  #allocation1 [shape = 'u32[144,128]{1,0:T(1,128)}', space=vmem, size = 0x12000, scoped, tag = 'internal scratch']
  %s0 = inlined_call_operand.hbm [shape: bf16[16,128], index: 0, kind: input, shape index: {}]
  %s1 = inlined_call_operand.hbm [shape: bf16[128,128], index: 1, kind: input, shape index: {}]
  %s2 = inlined_call_operand.vmem [shape: f32[1,128], index: 2, kind: input, shape index: {}]
  %s3 = inlined_call_operand.hbm [shape: f32[16,128], index: 3, kind: output, shape index: {}]
  %s4 = sld [smem:[#allocation0]]
  $region38: #{tpu_custom_call.1} parent=0
    _
  %s6 = ssub.s32 1, %s4
  %s7 = scalar_select 0, %s6, %s4
  $region1: #{tpu_custom_call.1} parent=0
    #allocation2 [shape = 'u8[4096]{0}', space=vmem, size = 0x1000, scoped, tag = 'input window, operand 0, single buffered']
    #allocation3 [shape = 's32[1]{0}', space=sflag, size = 0x4, scoped, tag = 'scoped memory for tpu_custom_call.1']
    #allocation4 [shape = 's32[1]{0}', space=sflag, size = 0x4, scoped, tag = 'scoped memory for tpu_custom_call.1']
    #allocation5 [shape = 'u8[32768]{0}', space=vmem, size = 0x8000, scoped, tag = 'input window, operand 1, single buffered']
    #allocation6 [shape = 's32[1]{0}', space=sflag, size = 0x4, scoped, tag = 'scoped memory for tpu_custom_call.1']
    #allocation7 [shape = 'u8[8192]{0}', space=vmem, size = 0x2000, scoped, tag = 'output window, operand 0, single buffered']
    %8 = vsyncpa [#allocation3], 0
    %9 = vsyncpa [#allocation6], 0
    %10 = vsyncpa [#allocation4], 0
    // Predicated region
    $region2: #{tpu_custom_call.1} parent=1 // pred_check
      _
    $region3: #{tpu_custom_call.1} parent=1 // pred_check_branch
      %12 = sbr.rel (0) target = $region5
    $region4: #{tpu_custom_call.1} parent=1 // pred_region
      %s14 = ssub.s32 128, 128
      %15 = vsyncadd [#allocation3], %s14
      %s16 = sshll.u32 [#allocation2], 4
      %s17 = int_to_ptr.vmem [resolvable:$true] %s16
      %22 = dma.hbm_to_vmem [thread:$0]  %s0, 128, %s17, [#allocation3], 64, 64, 4
    $region5: #{tpu_custom_call.1} parent=1 // pred_fallthru
      _
    // Predicated region
    $region6: #{tpu_custom_call.1} parent=1 // pred_check
      _
    $region7: #{tpu_custom_call.1} parent=1 // pred_check_branch
      %24 = sbr.rel (0) target = $region9
    $region8: #{tpu_custom_call.1} parent=1 // pred_region
      %s26 = ssub.s32 1024, 1024
      %27 = vsyncadd [#allocation6], %s26
      %s28 = sshll.u32 [#allocation5], 4
      %s29 = int_to_ptr.vmem [resolvable:$true] %s28
      %34 = dma.hbm_to_vmem [thread:$0]  %s1, 1024, %s29, [#allocation6], 64, 64, 4
    $region9: #{tpu_custom_call.1} parent=1 // pred_fallthru
      _
    // Predicated region
    $region10: #{tpu_custom_call.1} parent=1 // pred_check
      _
    $region11: #{tpu_custom_call.1} parent=1 // pred_check_branch
      %36 = sbr.rel (0) target = $region13
    $region12: #{tpu_custom_call.1} parent=1 // pred_region
      _
    $region13: #{tpu_custom_call.1} parent=1 // pred_fallthru
      _
    // Predicated region
    $region14: #{tpu_custom_call.1} parent=1 // pred_check
      _
    $region15: #{tpu_custom_call.1} parent=1 // pred_check_branch
      %38 = sbr.rel (0) target = $region17
    $region16: #{tpu_custom_call.1} parent=1 // pred_region
      %39 = dma.done [#allocation3], 128
    $region17: #{tpu_custom_call.1} parent=1 // pred_fallthru
      _
    // Predicated region
    $region18: #{tpu_custom_call.1} parent=1 // pred_check
      _
    $region19: #{tpu_custom_call.1} parent=1 // pred_check_branch
      %41 = sbr.rel (0) target = $region21
    $region20: #{tpu_custom_call.1} parent=1 // pred_region
      %42 = dma.done [#allocation6], 1024
    $region21: #{tpu_custom_call.1} parent=1 // pred_fallthru
      _
    %p44 = scmp.eq.s32.totalorder 0, 0
    // Predicated region
    $region22: #{tpu_custom_call.1} parent=1 // pred_check
      %p45 = pneg %p44
    $region23: #{tpu_custom_call.1} parent=1 // pred_check_branch
      %47 = sbr.rel (%p45) target = $region25
    $region24: #{tpu_custom_call.1} parent=1 // pred_region
      %48 = vst [vmem:[#allocation7] sm:$0xff] 0.0
      %49 = vst [vmem:[#allocation7 + $0x8] sm:$0xff] 0.0
    $region25: #{tpu_custom_call.1} parent=1 // pred_fallthru
      _
    %v50 = vld [vmem:[#allocation7] sm:$0xff]
    %v51 = vld [vmem:[#allocation7 + $0x8] sm:$0xff]
    %v52 = vld [vmem:[#allocation2] sm:$0xf]
    %v53 = vld [vmem:[#allocation2 + $0x4] sm:$0xf]
    %v54 = vld [vmem:[#allocation5] sm:$0xf]
    %v55 = vld [vmem:[#allocation5 + $0x4] sm:$0xf]
    %v56 = vld [vmem:[#allocation5 + $0x8] sm:$0xf]
    %v57 = vld [vmem:[#allocation5 + $0xc] sm:$0xf]
    %v58 = vld [vmem:[#allocation5 + $0x10] sm:$0xf]
    %v59 = vld [vmem:[#allocation5 + $0x14] sm:$0xf]
    %v60 = vld [vmem:[#allocation5 + $0x18] sm:$0xf]
    %v61 = vld [vmem:[#allocation5 + $0x1c] sm:$0xf]
    %v62 = vld [vmem:[#allocation5 + $0x20] sm:$0xf]
    %v63 = vld [vmem:[#allocation5 + $0x24] sm:$0xf]
    %v64 = vld [vmem:[#allocation5 + $0x28] sm:$0xf]
    %v65 = vld [vmem:[#allocation5 + $0x2c] sm:$0xf]
    %v66 = vld [vmem:[#allocation5 + $0x30] sm:$0xf]
    %v67 = vld [vmem:[#allocation5 + $0x34] sm:$0xf]
    %v68 = vld [vmem:[#allocation5 + $0x38] sm:$0xf]
    %v69 = vld [vmem:[#allocation5 + $0x3c] sm:$0xf]
    %v72 = vunpack.c.l.b16 %v52
    %v73 = vunpack.c.l.b16 %v53
    %v74 = vpack.c.b16 %v73, %v72
    %v92 = vunpack.c.l.b16 %v54
    %v93 = vunpack.c.l.b16 %v55
    %v94 = vunpack.c.l.b16 %v56
    %v95 = vunpack.c.l.b16 %v57
    %v96 = vunpack.c.l.b16 %v58
    %v97 = vunpack.c.l.b16 %v59
    %v98 = vunpack.c.l.b16 %v60
    %v99 = vunpack.c.l.b16 %v61
    %v100 = vunpack.c.l.b16 %v62
    %v101 = vunpack.c.l.b16 %v63
    %v102 = vunpack.c.l.b16 %v64
    %v103 = vunpack.c.l.b16 %v65
    %v104 = vunpack.c.l.b16 %v66
    %v105 = vunpack.c.l.b16 %v67
    %v106 = vunpack.c.l.b16 %v68
    %v107 = vunpack.c.l.b16 %v69
    %v108 = vpack.c.b16 %v93, %v92
    %v109 = vpack.c.b16 %v95, %v94
    %v110 = vpack.c.b16 %v97, %v96
    %v111 = vpack.c.b16 %v99, %v98
    %v112 = vpack.c.b16 %v101, %v100
    %v113 = vpack.c.b16 %v103, %v102
    %v114 = vpack.c.b16 %v105, %v104
    %v115 = vpack.c.b16 %v107, %v106
    %124 = vmatprep.subr.bf16.mxu0 0
    %125 = vmatpush1.bf16.msra.mxu0 %v108
    %126 = vmatprep.subr.bf16.mxu0 0
    %127 = vmatpush1.bf16.msra.mxu0 %v109
    %128 = vmatprep.subr.bf16.mxu0 0
    %129 = vmatpush1.bf16.msra.mxu0 %v110
    %130 = vmatprep.subr.bf16.mxu0 0
    %131 = vmatpush1.bf16.msra.mxu0 %v111
    %132 = vmatprep.subr.bf16.mxu0 0
    %133 = vmatpush1.bf16.msra.mxu0 %v112
    %134 = vmatprep.subr.bf16.mxu0 0
    %135 = vmatpush1.bf16.msra.mxu0 %v113
    %136 = vmatprep.subr.bf16.mxu0 0
    %137 = vmatpush1.bf16.msra.mxu0 %v114
    %138 = vmatprep.subr.bf16.mxu0 0
    %139 = vmatpush1.bf16.msra.mxu0 %v115
    %140 = vmatprep.subr.bf16.mxu0 0
    %141 = vmatpush1.bf16.msra.mxu0 0
    %142 = vmatprep.subr.bf16.mxu0 0
    %143 = vmatpush1.bf16.msra.mxu0 0
    %144 = vmatprep.subr.bf16.mxu0 0
    %145 = vmatpush1.bf16.msra.mxu0 0
    %146 = vmatprep.subr.bf16.mxu0 0
    %147 = vmatpush1.bf16.msra.mxu0 0
    %148 = vmatprep.subr.bf16.mxu0 0
    %149 = vmatpush1.bf16.msra.mxu0 0
    %150 = vmatprep.subr.bf16.mxu0 0
    %151 = vmatpush1.bf16.msra.mxu0 0
    %152 = vmatprep.subr.bf16.mxu0 0
    %153 = vmatpush1.bf16.msra.mxu0 0
    %154 = vmatprep.subr.bf16.mxu0 0
    %155 = vmatpush1.bf16.msra.mxu0 0
    %156 = vmatprep.mubr.bf16.mxu0 0
    %157 = vmatmul.mubr.bf16.gmra.mrb[0].mxu0 %v74
    %v158 = vpop.f32.mrb[0].mxu0
    %v159 = vadd.f32 0.0, %v158
    %v160 = vpop.f32.mrb[0].mxu0
    %v161 = vpop.f32.mrb[0].mxu0
    %v162 = vadd.f32 0.0, %v161
    %v163 = vpop.f32.mrb[0].mxu0
    %164 = vdwg.mxu0
    %v165 = vadd.f32 %v50, %v159
    %v166 = vadd.f32 %v51, %v162
    %167 = vst [vmem:[#allocation7] sm:$0xff] %v165
    %168 = vst [vmem:[#allocation7 + $0x8] sm:$0xff] %v166
    // Predicated region
    $region26: #{tpu_custom_call.1} parent=1 // pred_check
      %p169 = pneg %p44
    $region27: #{tpu_custom_call.1} parent=1 // pred_check_branch
      %171 = sbr.rel (%p169) target = $region29
    $region28: #{tpu_custom_call.1} parent=1 // pred_region
      %v172 = vld [vmem:[#allocation7] sm:$0xff]
      %v173 = vld [vmem:[#allocation7 + $0x8] sm:$0xff]
      %v174 = vmul.f32 %v172, 0.17677669
      %v175 = vmul.f32 %v173, 0.17677669
      %v176 = vld [vmem:[%s2] sm:$0x1]
      %v178 = vlaneseq
      %v179 = vshrl.u32 %v178, 7
      %v180 = vsub.s32 0, %v179
      %v181 = vrot.slane %v176, %v180
      %v183 = vadd.f32 %v174, %v181
      %v184 = vadd.f32 %v175, %v181
      %185 = vst [vmem:[#allocation7] sm:$0xff] %v183
      %186 = vst [vmem:[#allocation7 + $0x8] sm:$0xff] %v184
    $region29: #{tpu_custom_call.1} parent=1 // pred_fallthru
      _
    // Predicated region
    $region30: #{tpu_custom_call.1} parent=1 // pred_check
      _
    $region31: #{tpu_custom_call.1} parent=1 // pred_check_branch
      %188 = sbr.rel (0) target = $region33
    $region32: #{tpu_custom_call.1} parent=1 // pred_region
      %s190 = ssub.s32 256, 256
      %191 = vsyncadd [#allocation4], %s190
      %s192 = sshll.u32 [#allocation7], 4
      %s193 = int_to_ptr.vmem [resolvable:$true] %s192
      %198 = dma.vmem_to_hbm [thread:$0]  %s193, 256, %s3, [#allocation4], 128, 128, 8
    $region33: #{tpu_custom_call.1} parent=1 // pred_fallthru
      _
    // Predicated region
    $region34: #{tpu_custom_call.1} parent=1 // pred_check
      _
    $region35: #{tpu_custom_call.1} parent=1 // pred_check_branch
      %200 = sbr.rel (0) target = $region37
    $region36: #{tpu_custom_call.1} parent=1 // pred_region
      %201 = dma.done [#allocation4], 256
    $region37: #{tpu_custom_call.1} parent=1 // pred_fallthru
      _
    %202 = vsyncpa [#allocation3], 1
    %203 = vsyncpa [#allocation6], 1
    %204 = vsyncpa [#allocation4], 1

</llo_original>
